<compile_context>
chip_gen: v5e
topology: v5e:2x2
jax: 0.10.0
libtpu: 0.0.40
codegen_flags: <defaults>
</compile_context>

<pallas_src>
import numpy as np
import jax
import jax.numpy as jnp
from jax import lax
from jax.experimental import pallas as pl
from jax.experimental.pallas import tpu as pltpu


def _round_up(x, m):
    return ((x + m - 1) // m) * m


def _pe_kernel(times_ref, invsel_ref, out_ref):
    # times_ref : (CDIM, TR) f32  lane-dense packed times; row G = 1.0, rows > G = 0
    # invsel_ref: (CDIM, L)  f32  rows 0..G-1: 1/timescales in lanes [g*D,(g+1)*D);
    #                             row G: phase (0 for sin lanes, pi/2 for cos lanes)
    # out_ref   : (TR, L)    f32  lane-dense sin/cos slab
    scaled = lax.dot_general(
        times_ref[...], invsel_ref[...],
        dimension_numbers=(((0,), (0,)), ((), ())),   # contract dim 0 of both (trans-LHS matmul)
        precision=jax.lax.Precision.HIGHEST,          # exact f32 on the MXU (args up to max_len)
        preferred_element_type=jnp.float32)
    out_ref[...] = jnp.sin(scaled)                    # cos folded in via the phase row


def positional_encoding_tf(P_time, d_model, max_len=500, MAX=10000):
    """JAX/Pallas equivalent of PositionalEncodingTF.forward.

    P_time: (T, B) array of observation times (time-major, like the module).
    Returns: (T, B, 2 * (d_model // 2)) float32 positional encodings
             (== (T, B, d_model) for even d_model, matching torch.cat([sin, cos])).
    Note: odd d_model drops the last feature, exactly like the PyTorch module.
    """
    del MAX  # stored but unused by the PyTorch module as well
    K = d_model // 2
    assert K >= 1, "d_model must be >= 2"
    D = 2 * K  # output feature width

    # ---- lane-packing geometry ---------------------------------------------
    if D < 128 and 128 % D == 0:
        G = 128 // D            # packed (t, b) elements per 128-lane output row
        L = 128
    else:
        G = 1
        L = _round_up(D, 128)   # pad lanes so stores stay unmasked; stripped below
    CDIM = _round_up(G + 1, 8)  # contraction dim padded to the f32 sublane tile

    # ---- host-side constants (float64, cast once) ---------------------------
    inv_ts = 1.0 / (max_len ** np.linspace(0.0, 1.0, K))                 # (K,)
    inv_pat = np.concatenate([inv_ts, inv_ts])                           # (D,) [sin | cos]
    phase_pat = np.concatenate([np.zeros(K), np.full(K, np.pi / 2.0)])   # (D,)
    invsel = np.zeros((CDIM, L), dtype=np.float64)
    for g in range(G):
        invsel[g, g * D:(g + 1) * D] = inv_pat        # scale row for lane-group g
        invsel[G, g * D:(g + 1) * D] = phase_pat      # shared phase row (multiplied by 1.0)
    invsel = jnp.asarray(invsel, dtype=jnp.float32)   # (CDIM, L)

    # ---- block sizing (generation-aware) ------------------------------------
    T, B = P_time.shape
    R = T * B
    rows = -(-R // G)                                  # packed output rows (cdiv)
    try:
        kind = jax.devices()[0].device_kind.lower()
    except Exception:  # pragma: no cover - defensive
        kind = ""
    # v5e/v6e have 128 MiB VMEM -> 8 MiB output blocks; v7x has 64 MiB -> cap at 4 MiB.
    target_bytes = (8 << 20) if ("v5" in kind or "v6" in kind) else (4 << 20)
    tr_cap = max(128, (target_bytes // (L * 4)) // 128 * 128)
    nblocks = -(-rows // tr_cap)
    if nblocks == 1 and rows >= 2 * 128:
        nblocks = 2                                    # >= 2 grid steps keeps both v7x TCs busy
    if nblocks == 1:
        TR = _round_up(rows, 8)                        # single block == full array dim
    else:
        TR = _round_up(-(-rows // nblocks), 128)       # balanced, lane-aligned row blocks
    rows_p = _round_up(rows, TR)

    # ---- pack, transpose (lane-dense) and augment the times -----------------
    times_flat = jnp.asarray(P_time, dtype=jnp.float32).reshape(R)
    pad = rows_p * G - R
    if pad:
        times_flat = jnp.pad(times_flat, (0, pad))     # padded tail rows are stripped below
    times_t = times_flat.reshape(rows_p, G).T          # (G, rows_p): lane-dense input layout
    times_aug = jnp.concatenate(
        [times_t,
         jnp.ones((1, rows_p), dtype=jnp.float32),     # row G: multiplies the phase row
         jnp.zeros((CDIM - G - 1, rows_p), dtype=jnp.float32)],
        axis=0)                                        # (CDIM, rows_p)

    out = pl.pallas_call(
        _pe_kernel,
        out_shape=jax.ShapeDtypeStruct((rows_p, L), jnp.float32),
        grid=(rows_p // TR,),
        in_specs=[
            pl.BlockSpec((CDIM, TR), lambda i: (0, i)),   # times: lane-dense, contiguous DMA
            pl.BlockSpec((CDIM, L), lambda i: (0, 0)),    # scale/phase matrix (tiny, resident)
        ],
        out_specs=pl.BlockSpec((TR, L), lambda i: (i, 0)),
        compiler_params=pltpu.CompilerParams(
            dimension_semantics=("parallel",),
            vmem_limit_bytes=32 * 1024 * 1024,
        ),
    )(times_aug, invsel)

    # ---- unpack: contiguous reshapes / slices only ---------------------------
    if G > 1:
        pe = out.reshape(rows_p * G, D)[:R]            # L == G*D exactly in this branch
    else:
        pe = out[:R, :D]                               # strip lane padding (if any)
    return pe.reshape(T, B, D)
    # TODO(synk): the PyTorch module's `.cuda()` device placement has no Pallas
    # equivalent; the result simply stays on the default JAX (TPU) device.


if __name__ == "__main__":
    # Small shapes consistent with the module: seq (time) = 8, batch = 4, d_model = 32.
    d_model = 32
    max_len = 500
    T, B = 8, 4

    key = jax.random.PRNGKey(0)
    # Observation times in [0, max_len), deterministic.
    P_time = jax.random.uniform(key, (T, B), dtype=jnp.float32) * float(max_len)

    pe = positional_encoding_tf(P_time, d_model, max_len=max_len)
    pe = jax.block_until_ready(pe)

    # Reference: the PyTorch getPE math in numpy / float64.
    ts_np = max_len ** np.linspace(0.0, 1.0, d_model // 2)
    t_np = np.asarray(P_time).astype(np.float64)[:, :, None]
    scaled_np = t_np / ts_np[None, None, :]
    ref = np.concatenate([np.sin(scaled_np), np.cos(scaled_np)], axis=-1).astype(np.float32)

    assert pe.shape == (T, B, d_model), pe.shape
    assert pe.dtype == jnp.float32
    # f32 sin/cos arguments reach |t/ts| ~ max_len (= 500): one ulp of the argument
    # is ~3e-5, so the kernel can legitimately differ from the float64 reference at
    # the ~1e-4 level.  5e-4 keeps >5x margin while still catching any real (O(1))
    # layout or math bug (and would catch a low-precision matmul path).
    np.testing.assert_allclose(np.asarray(pe), ref, rtol=5e-4, atol=5e-4)

    print("KERNEL_OK")
</pallas_src>

<mosaic_0001>
module attributes {stable_mosaic.version = 11 : i64} {
  func.func @_pe_kernel(%arg0: i32, %arg1: memref<8x8xf32, #tpu.memory_space<vmem>>, %arg2: memref<8x128xf32, #tpu.memory_space<vmem>>, %arg3: memref<8x128xf32, #tpu.memory_space<vmem>>) attributes {dimension_semantics = [#tpu.dimension_semantics<parallel>], iteration_bounds = array<i64: 1>, scalar_prefetch = 0 : i64, scratch_operands = 0 : i64, tpu.core_type = #tpu.core_type<tc>, window_params = [{transform_indices = @transform_0, window_bounds = array<i64: 8, 8>}, {pipeline_mode = #tpu.pipeline_mode<synchronous>, transform_indices = @transform_1, window_bounds = array<i64: 8, 128>}, {transform_indices = @transform_2, window_bounds = array<i64: 8, 128>}]} {
    %c0 = arith.constant 0 : index
    %c0_0 = arith.constant 0 : index
    %0 = vector.load %arg1[%c0, %c0_0] : memref<8x8xf32, #tpu.memory_space<vmem>>, vector<8x8xf32>
    %c0_1 = arith.constant 0 : index
    %c0_2 = arith.constant 0 : index
    %1 = vector.load %arg2[%c0_1, %c0_2] : memref<8x128xf32, #tpu.memory_space<vmem>>, vector<8x128xf32>
    %cst = arith.constant dense<0.000000e+00> : vector<8x128xf32>
    %2 = tpu.matmul %0, %1, %cst {dimension_numbers = #tpu.dot_dimension_numbers<[0], [0], [1], [1], [0, 1, 1, 1], [], []>, precision = #tpu.contract_precision<fp32>} : vector<8x8xf32>, vector<8x128xf32>, vector<8x128xf32> -> vector<8x128xf32>
    %3 = math.sin %2 : vector<8x128xf32>
    %c0_3 = arith.constant 0 : index
    %c0_4 = arith.constant 0 : index
    %4 = vector.load %arg3[%c0_3, %c0_4] : memref<8x128xf32, #tpu.memory_space<vmem>>, vector<8x128xf32>
    tpu.vector_store %arg3[%c0_3, %c0_4], %3 {strides = array<i32>} : memref<8x128xf32, #tpu.memory_space<vmem>>, vector<8x128xf32>,
    return
  }
  func.func @transform_0(%arg0: i32) -> (i32, i32) {
    %c0_i32 = arith.constant 0 : i32
    %c0_i32_0 = arith.constant 0 : i32
    return %c0_i32, %arg0 : i32, i32
  }
  func.func @transform_1(%arg0: i32) -> (i32, i32) {
    %c0_i32 = arith.constant 0 : i32
    %c0_i32_0 = arith.constant 0 : i32
    %c0_i32_1 = arith.constant 0 : i32
    return %c0_i32, %c0_i32_0 : i32, i32
  }
  func.func @transform_2(%arg0: i32) -> (i32, i32) {
    %c0_i32 = arith.constant 0 : i32
    %c0_i32_0 = arith.constant 0 : i32
    return %arg0, %c0_i32 : i32, i32
  }
}

</mosaic_0001>

<llo_original>
// kernel: tpu_custom_call.1
$region0: #{tpu_custom_call.1}
  #allocation0 [shape = 'u32[]', space=smem, size = 0x4, offset = 0x4, fixed_abs, tag = 'smem constant byte address 0x4 - core index']
  #allocation1 [shape = 'u32[72,128]{1,0:T(1,128)}', space=vmem, size = 0x9000, scoped, tag = 'internal scratch']
  %s0 = inlined_call_operand.hbm [shape: f32[8,8], index: 0, kind: input, shape index: {}]
  %s1 = inlined_call_operand.hbm [shape: f32[8,128], index: 1, kind: input, shape index: {}]
  %s2 = inlined_call_operand.hbm [shape: f32[8,128], index: 2, kind: output, shape index: {}]
  %s3 = sld [smem:[#allocation0]]
  $region26: #{tpu_custom_call.1} parent=0
    _
  %s5 = ssub.s32 1, %s3
  %s6 = scalar_select 0, %s5, %s3
  $region1: #{tpu_custom_call.1} parent=0
    #allocation2 [shape = 'u8[4096]{0}', space=vmem, size = 0x1000, scoped, tag = 'input window, operand 0, single buffered']
    #allocation3 [shape = 's32[1]{0}', space=sflag, size = 0x4, scoped, tag = 'scoped memory for tpu_custom_call.1']
    #allocation4 [shape = 's32[1]{0}', space=sflag, size = 0x4, scoped, tag = 'scoped memory for tpu_custom_call.1']
    #allocation5 [shape = 'u8[4096]{0}', space=vmem, size = 0x1000, scoped, tag = 'input window, operand 1, single buffered']
    #allocation6 [shape = 's32[1]{0}', space=sflag, size = 0x4, scoped, tag = 'scoped memory for tpu_custom_call.1']
    #allocation7 [shape = 'u8[4096]{0}', space=vmem, size = 0x1000, scoped, tag = 'output window, operand 0, single buffered']
    %7 = vsyncpa [#allocation3], 0
    %8 = vsyncpa [#allocation6], 0
    %9 = vsyncpa [#allocation4], 0
    // Predicated region
    $region2: #{tpu_custom_call.1} parent=1 // pred_check
      _
    $region3: #{tpu_custom_call.1} parent=1 // pred_check_branch
      %11 = sbr.rel (0) target = $region5
    $region4: #{tpu_custom_call.1} parent=1 // pred_region
      %13 = vsyncadd [#allocation3], 0
      %s15 = sshll.u32 %s0, 4
      %s16 = int_to_ptr.hbm [resolvable:$true] %s15
      %s17 = sshll.u32 [#allocation2], 4
      %s18 = int_to_ptr.vmem [resolvable:$true] %s17
      %20 = dma.hbm_to_vmem [thread:$0]  %s16, 128, %s18, [#allocation3]
    $region5: #{tpu_custom_call.1} parent=1 // pred_fallthru
      _
    // Predicated region
    $region6: #{tpu_custom_call.1} parent=1 // pred_check
      _
    $region7: #{tpu_custom_call.1} parent=1 // pred_check_branch
      %22 = sbr.rel (0) target = $region9
    $region8: #{tpu_custom_call.1} parent=1 // pred_region
      %24 = vsyncadd [#allocation6], 0
      %s26 = sshll.u32 %s1, 4
      %s27 = int_to_ptr.hbm [resolvable:$true] %s26
      %s28 = sshll.u32 [#allocation5], 4
      %s29 = int_to_ptr.vmem [resolvable:$true] %s28
      %31 = dma.hbm_to_vmem [thread:$0]  %s27, 128, %s29, [#allocation6]
    $region9: #{tpu_custom_call.1} parent=1 // pred_fallthru
      _
    // Predicated region
    $region10: #{tpu_custom_call.1} parent=1 // pred_check
      _
    $region11: #{tpu_custom_call.1} parent=1 // pred_check_branch
      %33 = sbr.rel (0) target = $region13
    $region12: #{tpu_custom_call.1} parent=1 // pred_region
      %35 = dma.done [#allocation3], 128
    $region13: #{tpu_custom_call.1} parent=1 // pred_fallthru
      _
    // Predicated region
    $region14: #{tpu_custom_call.1} parent=1 // pred_check
      _
    $region15: #{tpu_custom_call.1} parent=1 // pred_check_branch
      %37 = sbr.rel (0) target = $region17
    $region16: #{tpu_custom_call.1} parent=1 // pred_region
      %39 = dma.done [#allocation6], 128
    $region17: #{tpu_custom_call.1} parent=1 // pred_fallthru
      _
    %v40 = vld [vmem:[#allocation2] sm:$0xff]
    %v41 = vld [vmem:[#allocation5] sm:$0xff]
    %42 = vxpose.xlu0.b32.start [1/16] %v40, 128
    %43 = vxpose.xlu0.b32.cont [2/16] 0.0, 128
    %44 = vxpose.xlu0.b32.cont [3/16] 0.0, 128
    %45 = vxpose.xlu0.b32.cont [4/16] 0.0, 128
    %46 = vxpose.xlu0.b32.cont [5/16] 0.0, 128
    %47 = vxpose.xlu0.b32.cont [6/16] 0.0, 128
    %48 = vxpose.xlu0.b32.cont [7/16] 0.0, 128
    %49 = vxpose.xlu0.b32.cont [8/16] 0.0, 128
    %50 = vxpose.xlu0.b32.cont [9/16] 0.0, 128
    %51 = vxpose.xlu0.b32.cont [10/16] 0.0, 128
    %52 = vxpose.xlu0.b32.cont [11/16] 0.0, 128
    %53 = vxpose.xlu0.b32.cont [12/16] 0.0, 128
    %54 = vxpose.xlu0.b32.cont [13/16] 0.0, 128
    %55 = vxpose.xlu0.b32.cont [14/16] 0.0, 128
    %56 = vxpose.xlu0.b32.cont [15/16] 0.0, 128
    %57 = vxpose.xlu0.b32.end [16/16] 0.0, 128
    %v58 = vpop.trf.xlu0
    %v59 = vpop.trf.xlu0
    %v60 = vpop.trf.xlu0
    %v61 = vpop.trf.xlu0
    %v62 = vpop.trf.xlu0
    %v63 = vpop.trf.xlu0
    %v64 = vpop.trf.xlu0
    %v65 = vpop.trf.xlu0
    %v66 = vpop.trf.xlu0
    %v67 = vpop.trf.xlu0
    %v68 = vpop.trf.xlu0
    %v69 = vpop.trf.xlu0
    %v70 = vpop.trf.xlu0
    %v71 = vpop.trf.xlu0
    %v72 = vpop.trf.xlu0
    %v73 = vpop.trf.xlu0
    %vm74 = vcmask 64512
    %v76 = vsel %vm74, %v58, 0
    %78 = vmatpush.msra.mxu0 0.0
    %79 = vmatpush.msra.mxu0 0.0
    %80 = vmatpush.msra.mxu0 0.0
    %81 = vmatpush.msra.mxu0 0.0
    %82 = vmatpush.msra.mxu0 0.0
    %83 = vmatpush.msra.mxu0 0.0
    %84 = vmatpush.msra.mxu0 0.0
    %85 = vmatpush.msra.mxu0 0.0
    %86 = vmatpush.msra.mxu0 0.0
    %87 = vmatpush.msra.mxu0 0.0
    %88 = vmatpush.msra.mxu0 0.0
    %89 = vmatpush.msra.mxu0 0.0
    %90 = vmatpush.msra.mxu0 0.0
    %91 = vmatpush.msra.mxu0 0.0
    %92 = vmatpush.msra.mxu0 0.0
    %v93 = vand.u32 %v41, 4294901760
    %94 = vmatpush.msra.mxu0 %v93
    %v95 = vand.u32 %v76, 4294901760
    %v96 = vsub.f32 %v76, %v95
    %v97 = vand.u32 %v96, 4294901760
    %v98 = vsub.f32 %v96, %v97
    %v99 = vand.u32 %v98, 4294901760
    %100 = vmatmul.f32.gmra.mxu0 %v99
    %v101 = vpop.f32.mrf.mxu0
    %v102 = vadd.f32 0.0, %v101
    %103 = vdwg.mxu0
    %104 = vmatpush.msra.mxu0 0.0
    %105 = vmatpush.msra.mxu0 0.0
    %106 = vmatpush.msra.mxu0 0.0
    %107 = vmatpush.msra.mxu0 0.0
    %108 = vmatpush.msra.mxu0 0.0
    %109 = vmatpush.msra.mxu0 0.0
    %110 = vmatpush.msra.mxu0 0.0
    %111 = vmatpush.msra.mxu0 0.0
    %112 = vmatpush.msra.mxu0 0.0
    %113 = vmatpush.msra.mxu0 0.0
    %114 = vmatpush.msra.mxu0 0.0
    %115 = vmatpush.msra.mxu0 0.0
    %116 = vmatpush.msra.mxu0 0.0
    %117 = vmatpush.msra.mxu0 0.0
    %118 = vmatpush.msra.mxu0 0.0
    %v119 = vand.u32 %v41, 4294901760
    %v120 = vsub.f32 %v41, %v119
    %v121 = vand.u32 %v120, 4294901760
    %v122 = vsub.f32 %v120, %v121
    %v123 = vand.u32 %v122, 4294901760
    %124 = vmatpush.msra.mxu0 %v123
    %v125 = vand.u32 %v76, 4294901760
    %126 = vmatmul.f32.gmra.mxu0 %v125
    %v127 = vpop.f32.mrf.mxu0
    %v128 = vadd.f32 %v102, %v127
    %129 = vdwg.mxu0
    %130 = vmatpush.msra.mxu0 0.0
    %131 = vmatpush.msra.mxu0 0.0
    %132 = vmatpush.msra.mxu0 0.0
    %133 = vmatpush.msra.mxu0 0.0
    %134 = vmatpush.msra.mxu0 0.0
    %135 = vmatpush.msra.mxu0 0.0
    %136 = vmatpush.msra.mxu0 0.0
    %137 = vmatpush.msra.mxu0 0.0
    %138 = vmatpush.msra.mxu0 0.0
    %139 = vmatpush.msra.mxu0 0.0
    %140 = vmatpush.msra.mxu0 0.0
    %141 = vmatpush.msra.mxu0 0.0
    %142 = vmatpush.msra.mxu0 0.0
    %143 = vmatpush.msra.mxu0 0.0
    %144 = vmatpush.msra.mxu0 0.0
    %v145 = vand.u32 %v41, 4294901760
    %v146 = vsub.f32 %v41, %v145
    %147 = vmatpush.msra.mxu0 %v146
    %v148 = vand.u32 %v76, 4294901760
    %v149 = vsub.f32 %v76, %v148
    %150 = vmatmul.f32.gmra.mxu0 %v149
    %v151 = vpop.f32.mrf.mxu0
    %v152 = vadd.f32 %v128, %v151
    %153 = vdwg.mxu0
    %154 = vmatpush.msra.mxu0 0.0
    %155 = vmatpush.msra.mxu0 0.0
    %156 = vmatpush.msra.mxu0 0.0
    %157 = vmatpush.msra.mxu0 0.0
    %158 = vmatpush.msra.mxu0 0.0
    %159 = vmatpush.msra.mxu0 0.0
    %160 = vmatpush.msra.mxu0 0.0
    %161 = vmatpush.msra.mxu0 0.0
    %162 = vmatpush.msra.mxu0 0.0
    %163 = vmatpush.msra.mxu0 0.0
    %164 = vmatpush.msra.mxu0 0.0
    %165 = vmatpush.msra.mxu0 0.0
    %166 = vmatpush.msra.mxu0 0.0
    %167 = vmatpush.msra.mxu0 0.0
    %168 = vmatpush.msra.mxu0 0.0
    %v169 = vand.u32 %v41, 4294901760
    %170 = vmatpush.msra.mxu0 %v169
    %v171 = vand.u32 %v76, 4294901760
    %v172 = vsub.f32 %v76, %v171
    %v173 = vand.u32 %v172, 4294901760
    %174 = vmatmul.f32.gmra.mxu0 %v173
    %v175 = vpop.f32.mrf.mxu0
    %v176 = vadd.f32 %v152, %v175
    %177 = vdwg.mxu0
    %178 = vmatpush.msra.mxu0 0.0
    %179 = vmatpush.msra.mxu0 0.0
    %180 = vmatpush.msra.mxu0 0.0
    %181 = vmatpush.msra.mxu0 0.0
    %182 = vmatpush.msra.mxu0 0.0
    %183 = vmatpush.msra.mxu0 0.0
    %184 = vmatpush.msra.mxu0 0.0
    %185 = vmatpush.msra.mxu0 0.0
    %186 = vmatpush.msra.mxu0 0.0
    %187 = vmatpush.msra.mxu0 0.0
    %188 = vmatpush.msra.mxu0 0.0
    %189 = vmatpush.msra.mxu0 0.0
    %190 = vmatpush.msra.mxu0 0.0
    %191 = vmatpush.msra.mxu0 0.0
    %192 = vmatpush.msra.mxu0 0.0
    %v193 = vand.u32 %v41, 4294901760
    %v194 = vsub.f32 %v41, %v193
    %v195 = vand.u32 %v194, 4294901760
    %196 = vmatpush.msra.mxu0 %v195
    %v197 = vand.u32 %v76, 4294901760
    %198 = vmatmul.f32.gmra.mxu0 %v197
    %v199 = vpop.f32.mrf.mxu0
    %v200 = vadd.f32 %v176, %v199
    %201 = vdwg.mxu0
    %202 = vmatpush.msra.mxu0 0.0
    %203 = vmatpush.msra.mxu0 0.0
    %204 = vmatpush.msra.mxu0 0.0
    %205 = vmatpush.msra.mxu0 0.0
    %206 = vmatpush.msra.mxu0 0.0
    %207 = vmatpush.msra.mxu0 0.0
    %208 = vmatpush.msra.mxu0 0.0
    %209 = vmatpush.msra.mxu0 0.0
    %210 = vmatpush.msra.mxu0 0.0
    %211 = vmatpush.msra.mxu0 0.0
    %212 = vmatpush.msra.mxu0 0.0
    %213 = vmatpush.msra.mxu0 0.0
    %214 = vmatpush.msra.mxu0 0.0
    %215 = vmatpush.msra.mxu0 0.0
    %216 = vmatpush.msra.mxu0 0.0
    %v217 = vand.u32 %v41, 4294901760
    %218 = vmatpush.msra.mxu0 %v217
    %v219 = vand.u32 %v76, 4294901760
    %220 = vmatmul.f32.gmra.mxu0 %v219
    %v221 = vpop.f32.mrf.mxu0
    %v222 = vadd.f32 %v200, %v221
    %223 = vdwg.mxu0
    %v224 = vand.u32 2147483647, %v222
    %vm225 = vcmp.le.f32.partialorder %v224, 0.7853982
    %vm226 = vcmp.lt.s32.totalorder %v222, 0
    %v227 = vand.u32 %v222, 2139095040
    %v228 = vshrl.u32 %v227, 23
    %v229 = vsub.s32 %v228, 127
    %v230 = vand.u32 2147483647, %v222
    %v231 = vand.u32 %v230, 8388607
    %v232 = vor.u32 %v231, 8388608
    %v233 = vsub.s32 0, %v232
    %v234 = vadd.s32 %v229, 1
    %vm235 = vcmp.gt.s32.totalorder %v234, 0
    %v236 = vsel %vm235, %v234, 0
    %v237 = vshrl.u32 %v236, 5
    %v238 = vand.u32 %v236, 31
    %v239 = vsub.s32 32, %v238
    %v240 = vshrl.u32 683565275, %v239
    %v241 = vshll.u32 683565275, %v238
    %v242 = vshrl.u32 2475754826, %v239
    %v243 = vor.u32 %v241, %v242
    %v244 = vshll.u32 2475754826, %v238
    %v245 = vshrl.u32 2131351028, %v239
    %v246 = vor.u32 %v244, %v245
    %v247 = vshll.u32 2131351028, %v238
    %v248 = vshrl.u32 2102212464, %v239
    %v249 = vor.u32 %v247, %v248
    %v250 = vshll.u32 2102212464, %v238
    %v251 = vshrl.u32 920167782, %v239
    %v252 = vor.u32 %v250, %v251
    %v253 = vshll.u32 920167782, %v238
    %v254 = vshrl.u32 1326507024, %v239
    %v255 = vor.u32 %v253, %v254
    %vm256 = vcmp.lt.s32.totalorder %v237, 1
    %vm257 = vcmp.lt.s32.totalorder %v237, 2
    %vm258 = vcmp.lt.s32.totalorder %v237, 3
    %vm259 = vcmp.lt.s32.totalorder %v237, 4
    %v260 = vsel %vm256, %v240, %v243
    %v261 = vsel %vm259, %v249, 2102212464
    %v262 = vsel %vm258, %v246, %v261
    %v263 = vsel %vm257, %v260, %v262
    %v264 = vsel %vm256, %v243, %v246
    %v265 = vsel %vm259, %v252, 920167782
    %v266 = vsel %vm258, %v249, %v265
    %v267 = vsel %vm257, %v264, %v266
    %v268 = vsel %vm256, %v246, %v249
    %v269 = vsel %vm259, %v255, 1326507024
    %v270 = vsel %vm258, %v252, %v269
    %v271 = vsel %vm257, %v268, %v270
    %v272 = vshll.u32 %v232, 8
    %v273 = vand.u32 %v272, 65535
    %v274 = vshrl.u32 %v272, 16
    %v275 = vand.u32 %v271, 65535
    %v276 = vshrl.u32 %v271, 16
    %v277 = vmul.u32 %v273, %v275
    %v278 = vmul.u32 %v273, %v276
    %v279 = vmul.u32 %v274, %v275
    %v280 = vmul.u32 %v274, %v276
    %v281 = vshll.u32 %v278, 16
    %v282 = vshrl.u32 %v278, 16
    %v283 = vshll.u32 %v279, 16
    %v284 = vshrl.u32 %v279, 16
    %vm285 = vc.u32 %v277, %v281
    %v286 = vsel %vm285, 1, 0
    %v287 = vadd.s32 %v277, %v281
    %v288 = vadd.s32 %v280, %v286
    %vm289 = vc.u32 %v287, %v283
    %v290 = vsel %vm289, 1, 0
    %v291 = vadd.s32 %v287, %v283
    %v292 = vadd.s32 %v288, %v290
    %v293 = vadd.s32 %v292, %v282
    %v294 = vadd.s32 %v293, %v284
    %v295 = vand.u32 %v272, 65535
    %v296 = vshrl.u32 %v272, 16
    %v297 = vand.u32 %v267, 65535
    %v298 = vshrl.u32 %v267, 16
    %v299 = vmul.u32 %v295, %v297
    %v300 = vmul.u32 %v295, %v298
    %v301 = vmul.u32 %v296, %v297
    %v302 = vmul.u32 %v296, %v298
    %v303 = vshll.u32 %v300, 16
    %v304 = vshrl.u32 %v300, 16
    %v305 = vshll.u32 %v301, 16
    %v306 = vshrl.u32 %v301, 16
    %vm307 = vc.u32 %v299, %v303
    %v308 = vsel %vm307, 1, 0
    %v309 = vadd.s32 %v299, %v303
    %v310 = vadd.s32 %v302, %v308
    %vm311 = vc.u32 %v309, %v305
    %v312 = vsel %vm311, 1, 0
    %v313 = vadd.s32 %v309, %v305
    %v314 = vadd.s32 %v310, %v312
    %v315 = vadd.s32 %v314, %v304
    %v316 = vadd.s32 %v315, %v306
    %v317 = vmul.u32 %v272, %v263
    %v318 = vadd.s32 %v294, %v313
    %vm319 = vc.u32 %v294, %v313
    %v320 = vadd.s32 %v316, 1
    %v321 = vsel %vm319, %v320, %v316
    %v322 = vadd.s32 %v317, %v321
    %v323 = vadd.s32 %v322, 536870912
    %v324 = vshrl.u32 %v323, 30
    %v325 = vshll.u32 %v324, 30
    %v326 = vsub.s32 %v322, %v325
    %vm327 = vcmp.lt.s32.totalorder %v326, 0
    %v328 = vsub.s32 0, %v326
    %v329 = vsel %vm327, %v328, %v326
    %v330 = vclz %v329
    %v331 = vsub.s32 %v330, 2
    %vm332 = vcmp.gt.s32.totalorder 0, %v331
    %v333 = vsel %vm332, 0, %v331
    %v334 = vsub.s32 32, %v333
    %v335 = vshll.u32 %v326, %v333
    %v336 = vshrl.u32 %v318, %v334
    %v337 = vor.u32 %v335, %v336
    %v338 = vsub.s32 4294967266, %v333
    %v339 = vadd.s32 %v338, 127
    %v340 = vshll.u32 %v339, 23
    %v341 = vor.u32 4788187, %v340
    %v342 = vand.u32 2147483647, %v341
    %v344 = vcvt.s32.f32 %v337
    %v345 = vmul.f32 %v344, %v342
    %v346 = vxor.u32 %v345, 2147483648
    %v347 = vsel %vm226, %v346, %v345
    %v348 = vsub.s32 4, %v324
    %v349 = vsel %vm226, %v348, %v324
    %v350 = vsel %vm225, %v222, %v347
    %v351 = vsel %vm225, 0, %v349
    %v352 = vmul.f32 %v350, %v350
    %v353 = vmul.f32 %v352, -0.001358992
    %v354 = vadd.f32 %v353, 0.041655596
    %v355 = vmul.f32 %v352, %v354
    %v356 = vadd.f32 %v355, -0.4999988
    %v357 = vmul.f32 %v352, %v356
    %v358 = vadd.f32 1.0, %v357
    %v359 = vmul.f32 %v350, %v350
    %v360 = vmul.f32 %v359, -0.00019511016
    %v361 = vadd.f32 %v360, 0.008332121
    %v362 = vmul.f32 %v359, %v361
    %v363 = vadd.f32 %v362, -0.16666654
    %v364 = vmul.f32 %v359, %v363
    %v365 = vadd.f32 %v364, 1.0
    %v366 = vmul.f32 %v365, %v350
    %vm367 = vweird.f32 %v222
    %v368 = vadd.s32 %v351, 3
    %v369 = vand.u32 %v368, 3
    %vm370 = vcmp.lt.s32.totalorder %v369, 2
    %vm371 = vcmp.eq.s32.totalorder %v369, 0
    %v372 = vxor.u32 %v366, 2147483648
    %v373 = vsel %vm371, %v358, %v372
    %vm374 = vcmp.eq.s32.totalorder %v369, 2
    %v375 = vxor.u32 %v358, 2147483648
    %v376 = vsel %vm374, %v375, %v366
    %v377 = vsel %vm370, %v373, %v376
    %v378 = vsel %vm367, nan, %v377
    %379 = vst [vmem:[#allocation7] sm:$0xff] %v378
    // Predicated region
    $region18: #{tpu_custom_call.1} parent=1 // pred_check
      _
    $region19: #{tpu_custom_call.1} parent=1 // pred_check_branch
      %381 = sbr.rel (0) target = $region21
    $region20: #{tpu_custom_call.1} parent=1 // pred_region
      %383 = vsyncadd [#allocation4], 0
      %s385 = sshll.u32 [#allocation7], 4
      %s386 = int_to_ptr.vmem [resolvable:$true] %s385
      %s387 = sshll.u32 %s2, 4
      %s388 = int_to_ptr.hbm [resolvable:$true] %s387
      %390 = dma.vmem_to_hbm [thread:$0]  %s386, 128, %s388, [#allocation4]
    $region21: #{tpu_custom_call.1} parent=1 // pred_fallthru
      _
    // Predicated region
    $region22: #{tpu_custom_call.1} parent=1 // pred_check
      _
    $region23: #{tpu_custom_call.1} parent=1 // pred_check_branch
      %392 = sbr.rel (0) target = $region25
    $region24: #{tpu_custom_call.1} parent=1 // pred_region
      %394 = dma.done [#allocation4], 128
    $region25: #{tpu_custom_call.1} parent=1 // pred_fallthru
      _
    %395 = vsyncpa [#allocation3], 1
    %396 = vsyncpa [#allocation6], 1
    %397 = vsyncpa [#allocation4], 1

</llo_original>
